<compile_context>
chip_gen: v5e
topology: v5e:2x2
jax: 0.10.0
libtpu: 0.0.40
codegen_flags: <defaults>
</compile_context>

<pallas_src>
import jax
import jax.numpy as jnp
from jax.experimental import pallas as pl
from jax.experimental.pallas import tpu as pltpu


IN_FEATURES = 28 * 28      # 784
HIDDEN = 128
OUT_FEATURES = 10


def _round_up(n, m):
    return ((n + m - 1) // m) * m


def _choose_tb(batch, tb_max):
    """Batch-tile rows: multiple of 8 (f32 sublane), <= tb_max, and — when the batch
    allows — small enough that the grid has >= 2 blocks for v7x's two TensorCores."""
    tb_max = max(8, (tb_max // 8) * 8)
    half = _round_up(pl.cdiv(batch, 2), 8)
    return min(tb_max, max(half, 8))


def _vmem_limit_bytes(tb):
    """Scoped-VMEM request sized to the actual working set (+ headroom), never the
    full physical VMEM (v7x only has 64 MiB)."""
    x_tile = tb * IN_FEATURES * 4                       # f32 input tile
    out_tile = tb * OUT_FEATURES * 4                    # f32 output tile
    weights = (IN_FEATURES * HIDDEN + HIDDEN * OUT_FEATURES) * 2 \
              + (HIDDEN + OUT_FEATURES) * 4
    need = 2 * (x_tile + out_tile + weights)            # double buffering
    need = int(need * 1.25) + (2 << 20)                 # scheduler/scratch headroom
    return int(min(max(need, 16 << 20), 32 << 20))


def mlp_kernel(x_ref, w1_ref, b1_ref, w2_ref, b2_ref, o_ref):
    # fc1: cast the streamed f32 tile to bf16 in-kernel (free under the DMA shadow),
    # MXU matmul with f32 accumulation; bias + ReLU in f32 on the VPU.
    x = x_ref[...].astype(jnp.bfloat16)
    h = jnp.dot(x, w1_ref[...], preferred_element_type=jnp.float32)
    h = jnp.maximum(h + b1_ref[...], 0.0)
    # Dropout(p=0.2) is identity in eval/inference mode.
    # TODO(synk): training-mode dropout (Bernoulli mask * 1/(1-p)) would use
    #             pltpu.prng_seed / pltpu.prng_random_bits.
    # fc2: narrow 10-lane output; huge store-slot slack hides the masked store.
    out = jnp.dot(h.astype(jnp.bfloat16), w2_ref[...],
                  preferred_element_type=jnp.float32)
    o_ref[...] = (out + b2_ref[...]).astype(o_ref.dtype)


def neural_net_forward(x, w1, b1, w2, b2, *, tb_max=2048):
    """x: [B, 784] f32; w1: [784, 128]; b1: [128]/[1,128]; w2: [128, 10]; b2: [10]/[1,10].

    Returns [B, 10] f32 logits.
    """
    batch = x.shape[0]
    tb = _choose_tb(batch, tb_max)
    grid = (pl.cdiv(batch, tb),)

    # Weights are tiny (~0.2 MiB) -> cast once, stay VMEM-resident inside the kernel.
    w1_b = w1.astype(jnp.bfloat16)
    w2_b = w2.astype(jnp.bfloat16)
    b1_r = jnp.reshape(b1, (1, HIDDEN)).astype(jnp.float32)
    b2_r = jnp.reshape(b2, (1, OUT_FEATURES)).astype(jnp.float32)

    flops = 2 * batch * (IN_FEATURES * HIDDEN + HIDDEN * OUT_FEATURES)
    bytes_accessed = (x.size * 4 + w1_b.size * 2 + w2_b.size * 2
                      + b1_r.size * 4 + b2_r.size * 4
                      + batch * OUT_FEATURES * 4)

    return pl.pallas_call(
        mlp_kernel,
        out_shape=jax.ShapeDtypeStruct((batch, OUT_FEATURES), jnp.float32),
        grid=grid,
        in_specs=[
            # x streamed per batch tile; full-K (784) block == full array dim, legal.
            pl.BlockSpec((tb, IN_FEATURES), lambda i: (i, 0)),
            pl.BlockSpec((IN_FEATURES, HIDDEN), lambda i: (0, 0)),     # w1: resident
            pl.BlockSpec((1, HIDDEN), lambda i: (0, 0)),               # b1: resident
            pl.BlockSpec((HIDDEN, OUT_FEATURES), lambda i: (0, 0)),    # w2: resident
            pl.BlockSpec((1, OUT_FEATURES), lambda i: (0, 0)),         # b2: resident
        ],
        out_specs=pl.BlockSpec((tb, OUT_FEATURES), lambda i: (i, 0)),
        compiler_params=pltpu.CompilerParams(
            dimension_semantics=("parallel",),
            vmem_limit_bytes=_vmem_limit_bytes(tb),
        ),
        cost_estimate=pl.CostEstimate(
            flops=flops, transcendentals=0, bytes_accessed=bytes_accessed),
    )(x, w1_b, b1_r, w2_b, b2_r)


def init_params(key):
    """Deterministic init matching torch.nn.Linear defaults (transposed layout)."""
    k1, k2, k3, k4 = jax.random.split(key, 4)
    lim1 = 1.0 / jnp.sqrt(jnp.float32(IN_FEATURES))
    lim2 = 1.0 / jnp.sqrt(jnp.float32(HIDDEN))
    w1 = jax.random.uniform(k1, (IN_FEATURES, HIDDEN), jnp.float32, -lim1, lim1)
    b1 = jax.random.uniform(k2, (1, HIDDEN), jnp.float32, -lim1, lim1)
    w2 = jax.random.uniform(k3, (HIDDEN, OUT_FEATURES), jnp.float32, -lim2, lim2)
    b2 = jax.random.uniform(k4, (1, OUT_FEATURES), jnp.float32, -lim2, lim2)
    return w1, b1, w2, b2


def _reference_bf16(x, w1, b1, w2, b2):
    """Same bf16-MXU / f32-accumulate math as the kernel, in plain JAX."""
    h = jnp.dot(x.astype(jnp.bfloat16), w1.astype(jnp.bfloat16),
                preferred_element_type=jnp.float32) + jnp.reshape(b1, (1, HIDDEN))
    h = jnp.maximum(h, 0.0)
    return jnp.dot(h.astype(jnp.bfloat16), w2.astype(jnp.bfloat16),
                   preferred_element_type=jnp.float32) + jnp.reshape(b2, (1, OUT_FEATURES))


if __name__ == "__main__":
    key = jax.random.PRNGKey(0)
    k_x, k_x2, k_p = jax.random.split(key, 3)

    w1, b1, w2, b2 = init_params(k_p)

    # Small-batch smoke test.
    B = 8
    x = jax.random.normal(k_x, (B, IN_FEATURES), jnp.float32)
    out = neural_net_forward(x, w1, b1, w2, b2)
    jax.block_until_ready(out)
    assert out.shape == (B, OUT_FEATURES)

    # Reference 1: same bf16 matmul path in plain JAX (tight tolerance).
    assert jnp.allclose(out, _reference_bf16(x, w1, b1, w2, b2), atol=1e-2, rtol=1e-2)

    # Reference 2: full f32 math (looser tolerance for the bf16 quantization).
    ref_f32 = jnp.maximum(x @ w1 + jnp.reshape(b1, (1, -1)), 0.0) @ w2 + jnp.reshape(b2, (1, -1))
    assert jnp.allclose(out, ref_f32, atol=5e-2, rtol=5e-2)

    # Ragged batch: B not a multiple of the tile -> exercises the partial last block
    # (out-of-range rows are read-padded and write-masked; matmul is row-independent).
    B2 = 13
    x2 = jax.random.normal(k_x2, (B2, IN_FEATURES), jnp.float32)
    out2 = neural_net_forward(x2, w1, b1, w2, b2, tb_max=8)   # forces a 2-block grid
    jax.block_until_ready(out2)
    assert out2.shape == (B2, OUT_FEATURES)
    assert jnp.allclose(out2, _reference_bf16(x2, w1, b1, w2, b2), atol=1e-2, rtol=1e-2)

    print("KERNEL_OK")
</pallas_src>

<mosaic_0001>
module attributes {stable_mosaic.version = 11 : i64} {
  func.func @mlp_kernel(%arg0: i32, %arg1: memref<8x784xf32, #tpu.memory_space<vmem>>, %arg2: memref<784x128xbf16, #tpu.memory_space<vmem>>, %arg3: memref<1x128xf32, #tpu.memory_space<vmem>>, %arg4: memref<128x10xbf16, #tpu.memory_space<vmem>>, %arg5: memref<1x10xf32, #tpu.memory_space<vmem>>, %arg6: memref<8x10xf32, #tpu.memory_space<vmem>>) attributes {dimension_semantics = [#tpu.dimension_semantics<parallel>], iteration_bounds = array<i64: 1>, scalar_prefetch = 0 : i64, scratch_operands = 0 : i64, tpu.core_type = #tpu.core_type<tc>, window_params = [{transform_indices = @transform_0, window_bounds = array<i64: 8, 784>}, {pipeline_mode = #tpu.pipeline_mode<synchronous>, transform_indices = @transform_1, window_bounds = array<i64: 784, 128>}, {pipeline_mode = #tpu.pipeline_mode<synchronous>, transform_indices = @transform_2, window_bounds = array<i64: 1, 128>}, {pipeline_mode = #tpu.pipeline_mode<synchronous>, transform_indices = @transform_3, window_bounds = array<i64: 128, 10>}, {pipeline_mode = #tpu.pipeline_mode<synchronous>, transform_indices = @transform_4, window_bounds = array<i64: 1, 10>}, {transform_indices = @transform_5, window_bounds = array<i64: 8, 10>}]} {
    %c0 = arith.constant 0 : index
    %c0_0 = arith.constant 0 : index
    %0 = vector.load %arg1[%c0, %c0_0] : memref<8x784xf32, #tpu.memory_space<vmem>>, vector<8x784xf32>
    %1 = arith.truncf %0 : vector<8x784xf32> to vector<8x784xbf16>
    %c0_1 = arith.constant 0 : index
    %c0_2 = arith.constant 0 : index
    %2 = vector.load %arg2[%c0_1, %c0_2] : memref<784x128xbf16, #tpu.memory_space<vmem>>, vector<784x128xbf16>
    %cst = arith.constant dense<0.000000e+00> : vector<8x128xf32>
    %3 = tpu.matmul %1, %2, %cst {dimension_numbers = #tpu.dot_dimension_numbers<[1], [0], [0], [1], [0, 0, 1, 1], [], []>} : vector<8x784xbf16>, vector<784x128xbf16>, vector<8x128xf32> -> vector<8x128xf32>
    %c0_3 = arith.constant 0 : index
    %c0_4 = arith.constant 0 : index
    %4 = vector.load %arg3[%c0_3, %c0_4] : memref<1x128xf32, #tpu.memory_space<vmem>>, vector<1x128xf32>
    %5 = vector.broadcast %4 : vector<1x128xf32> to vector<8x128xf32>
    %6 = arith.addf %3, %5 : vector<8x128xf32>
    %cst_5 = arith.constant 0.000000e+00 : f32
    %7 = vector.broadcast %cst_5 : f32 to vector<8x128xf32>
    %8 = arith.maximumf %6, %7 : vector<8x128xf32>
    %9 = arith.truncf %8 : vector<8x128xf32> to vector<8x128xbf16>
    %c0_6 = arith.constant 0 : index
    %c0_7 = arith.constant 0 : index
    %10 = vector.load %arg4[%c0_6, %c0_7] : memref<128x10xbf16, #tpu.memory_space<vmem>>, vector<128x10xbf16>
    %cst_8 = arith.constant dense<0.000000e+00> : vector<8x10xf32>
    %11 = tpu.matmul %9, %10, %cst_8 {dimension_numbers = #tpu.dot_dimension_numbers<[1], [0], [0], [1], [0, 0, 1, 1], [], []>} : vector<8x128xbf16>, vector<128x10xbf16>, vector<8x10xf32> -> vector<8x10xf32>
    %c0_9 = arith.constant 0 : index
    %c0_10 = arith.constant 0 : index
    %12 = vector.load %arg5[%c0_9, %c0_10] : memref<1x10xf32, #tpu.memory_space<vmem>>, vector<1x10xf32>
    %13 = vector.broadcast %12 : vector<1x10xf32> to vector<8x10xf32>
    %14 = arith.addf %11, %13 : vector<8x10xf32>
    %c0_11 = arith.constant 0 : index
    %c0_12 = arith.constant 0 : index
    %15 = vector.load %arg6[%c0_11, %c0_12] : memref<8x10xf32, #tpu.memory_space<vmem>>, vector<8x10xf32>
    tpu.vector_store %arg6[%c0_11, %c0_12], %14 {strides = array<i32>} : memref<8x10xf32, #tpu.memory_space<vmem>>, vector<8x10xf32>,
    return
  }
  func.func @transform_0(%arg0: i32) -> (i32, i32) {
    %c0_i32 = arith.constant 0 : i32
    %c0_i32_0 = arith.constant 0 : i32
    return %arg0, %c0_i32 : i32, i32
  }
  func.func @transform_1(%arg0: i32) -> (i32, i32) {
    %c0_i32 = arith.constant 0 : i32
    %c0_i32_0 = arith.constant 0 : i32
    %c0_i32_1 = arith.constant 0 : i32
    return %c0_i32, %c0_i32_0 : i32, i32
  }
  func.func @transform_2(%arg0: i32) -> (i32, i32) {
    %c0_i32 = arith.constant 0 : i32
    %c0_i32_0 = arith.constant 0 : i32
    %c0_i32_1 = arith.constant 0 : i32
    return %c0_i32, %c0_i32_0 : i32, i32
  }
  func.func @transform_3(%arg0: i32) -> (i32, i32) {
    %c0_i32 = arith.constant 0 : i32
    %c0_i32_0 = arith.constant 0 : i32
    %c0_i32_1 = arith.constant 0 : i32
    return %c0_i32, %c0_i32_0 : i32, i32
  }
  func.func @transform_4(%arg0: i32) -> (i32, i32) {
    %c0_i32 = arith.constant 0 : i32
    %c0_i32_0 = arith.constant 0 : i32
    %c0_i32_1 = arith.constant 0 : i32
    return %c0_i32, %c0_i32_0 : i32, i32
  }
  func.func @transform_5(%arg0: i32) -> (i32, i32) {
    %c0_i32 = arith.constant 0 : i32
    %c0_i32_0 = arith.constant 0 : i32
    return %arg0, %c0_i32 : i32, i32
  }
}

</mosaic_0001>

<llo_original>
// kernel: tpu_custom_call.1
$region0: #{tpu_custom_call.1}
  #allocation0 [shape = 'u32[]', space=smem, size = 0x4, offset = 0x4, fixed_abs, tag = 'smem constant byte address 0x4 - core index']
  #allocation1 [shape = 'u32[72,128]{1,0:T(1,128)}', space=vmem, size = 0x9000, scoped, tag = 'internal scratch']
  %s0 = inlined_call_operand.vmem [shape: f32[8,784], index: 0, kind: input, shape index: {}]
  %s1 = inlined_call_operand.hbm [shape: bf16[784,128], index: 1, kind: input, shape index: {}]
  %s2 = inlined_call_operand.vmem [shape: f32[1,128], index: 2, kind: input, shape index: {}]
  %s3 = inlined_call_operand.vmem [shape: bf16[128,10], index: 3, kind: input, shape index: {}]
  %s4 = inlined_call_operand.vmem [shape: f32[1,10], index: 4, kind: input, shape index: {}]
  %s5 = inlined_call_operand.hbm [shape: f32[8,10], index: 5, kind: output, shape index: {}]
  %s6 = sld [smem:[#allocation0]]
  $region34: #{tpu_custom_call.1} parent=0
    _
  %s8 = ssub.s32 1, %s6
  %s9 = scalar_select 0, %s8, %s6
  $region1: #{tpu_custom_call.1} parent=0
    #allocation2 [shape = 'u8[200704]{0}', space=vmem, size = 0x31000, scoped, tag = 'input window, operand 1, single buffered']
    #allocation3 [shape = 's32[1]{0}', space=sflag, size = 0x4, scoped, tag = 'scoped memory for tpu_custom_call.1']
    #allocation4 [shape = 's32[1]{0}', space=sflag, size = 0x4, scoped, tag = 'scoped memory for tpu_custom_call.1']
    #allocation5 [shape = 'u8[4096]{0}', space=vmem, size = 0x1000, scoped, tag = 'output window, operand 0, single buffered']
    %10 = vsyncpa [#allocation3], 0
    %11 = vsyncpa [#allocation4], 0
    // Predicated region
    $region2: #{tpu_custom_call.1} parent=1 // pred_check
      _
    $region3: #{tpu_custom_call.1} parent=1 // pred_check_branch
      %13 = sbr.rel (0) target = $region5
    $region4: #{tpu_custom_call.1} parent=1 // pred_region
      _
    $region5: #{tpu_custom_call.1} parent=1 // pred_fallthru
      _
    // Predicated region
    $region6: #{tpu_custom_call.1} parent=1 // pred_check
      _
    $region7: #{tpu_custom_call.1} parent=1 // pred_check_branch
      %15 = sbr.rel (0) target = $region9
    $region8: #{tpu_custom_call.1} parent=1 // pred_region
      %17 = vsyncadd [#allocation3], 0
      %s18 = sshll.u32 %s1, 4
      %s19 = int_to_ptr.hbm [resolvable:$true] %s18
      %s20 = sshll.u32 [#allocation2], 4
      %s21 = int_to_ptr.vmem [resolvable:$true] %s20
      %26 = dma.hbm_to_vmem [thread:$0]  %s19, 6272, %s21, [#allocation3], 64, 64, 4
    $region9: #{tpu_custom_call.1} parent=1 // pred_fallthru
      _
    // Predicated region
    $region10: #{tpu_custom_call.1} parent=1 // pred_check
      _
    $region11: #{tpu_custom_call.1} parent=1 // pred_check_branch
      %28 = sbr.rel (0) target = $region13
    $region12: #{tpu_custom_call.1} parent=1 // pred_region
      _
    $region13: #{tpu_custom_call.1} parent=1 // pred_fallthru
      _
    // Predicated region
    $region14: #{tpu_custom_call.1} parent=1 // pred_check
      _
    $region15: #{tpu_custom_call.1} parent=1 // pred_check_branch
      %30 = sbr.rel (0) target = $region17
    $region16: #{tpu_custom_call.1} parent=1 // pred_region
      _
    $region17: #{tpu_custom_call.1} parent=1 // pred_fallthru
      _
    // Predicated region
    $region18: #{tpu_custom_call.1} parent=1 // pred_check
      _
    $region19: #{tpu_custom_call.1} parent=1 // pred_check_branch
      %32 = sbr.rel (0) target = $region21
    $region20: #{tpu_custom_call.1} parent=1 // pred_region
      _
    $region21: #{tpu_custom_call.1} parent=1 // pred_fallthru
      _
    // Predicated region
    $region22: #{tpu_custom_call.1} parent=1 // pred_check
      _
    $region23: #{tpu_custom_call.1} parent=1 // pred_check_branch
      %34 = sbr.rel (0) target = $region25
    $region24: #{tpu_custom_call.1} parent=1 // pred_region
      %36 = dma.done [#allocation3], 6272
    $region25: #{tpu_custom_call.1} parent=1 // pred_fallthru
      _
    %v38 = vld [vmem:[%s0] sm:$0xff]
    %v39 = vld [vmem:[%s0 + $0x8] sm:$0xff]
    %v40 = vld [vmem:[%s0 + $0x10] sm:$0xff]
    %v41 = vld [vmem:[%s0 + $0x18] sm:$0xff]
    %v42 = vld [vmem:[%s0 + $0x20] sm:$0xff]
    %v43 = vld [vmem:[%s0 + $0x28] sm:$0xff]
    %v44 = vld [vmem:[%s0 + $0x30] sm:$0xff]
    %v45 = vpack.c.bf16 %v38, %v38
    %v46 = vpack.c.bf16 %v39, %v39
    %v47 = vpack.c.bf16 %v40, %v40
    %v48 = vpack.c.bf16 %v41, %v41
    %v49 = vpack.c.bf16 %v42, %v42
    %v50 = vpack.c.bf16 %v43, %v43
    %v51 = vpack.c.bf16 %v44, %v44
    %v52 = vld [vmem:[#allocation2] sm:$0xf]
    %v53 = vld [vmem:[#allocation2 + $0x4] sm:$0xf]
    %v54 = vld [vmem:[#allocation2 + $0x8] sm:$0xf]
    %v55 = vld [vmem:[#allocation2 + $0xc] sm:$0xf]
    %v56 = vld [vmem:[#allocation2 + $0x10] sm:$0xf]
    %v57 = vld [vmem:[#allocation2 + $0x14] sm:$0xf]
    %v58 = vld [vmem:[#allocation2 + $0x18] sm:$0xf]
    %v59 = vld [vmem:[#allocation2 + $0x1c] sm:$0xf]
    %v60 = vld [vmem:[#allocation2 + $0x20] sm:$0xf]
    %v61 = vld [vmem:[#allocation2 + $0x24] sm:$0xf]
    %v62 = vld [vmem:[#allocation2 + $0x28] sm:$0xf]
    %v63 = vld [vmem:[#allocation2 + $0x2c] sm:$0xf]
    %v64 = vld [vmem:[#allocation2 + $0x30] sm:$0xf]
    %v65 = vld [vmem:[#allocation2 + $0x34] sm:$0xf]
    %v66 = vld [vmem:[#allocation2 + $0x38] sm:$0xf]
    %v67 = vld [vmem:[#allocation2 + $0x3c] sm:$0xf]
    %v68 = vld [vmem:[#allocation2 + $0x40] sm:$0xf]
    %v69 = vld [vmem:[#allocation2 + $0x44] sm:$0xf]
    %v70 = vld [vmem:[#allocation2 + $0x48] sm:$0xf]
    %v71 = vld [vmem:[#allocation2 + $0x4c] sm:$0xf]
    %v72 = vld [vmem:[#allocation2 + $0x50] sm:$0xf]
    %v73 = vld [vmem:[#allocation2 + $0x54] sm:$0xf]
    %v74 = vld [vmem:[#allocation2 + $0x58] sm:$0xf]
    %v75 = vld [vmem:[#allocation2 + $0x5c] sm:$0xf]
    %v76 = vld [vmem:[#allocation2 + $0x60] sm:$0xf]
    %v77 = vld [vmem:[#allocation2 + $0x64] sm:$0xf]
    %v78 = vld [vmem:[#allocation2 + $0x68] sm:$0xf]
    %v79 = vld [vmem:[#allocation2 + $0x6c] sm:$0xf]
    %v80 = vld [vmem:[#allocation2 + $0x70] sm:$0xf]
    %v81 = vld [vmem:[#allocation2 + $0x74] sm:$0xf]
    %v82 = vld [vmem:[#allocation2 + $0x78] sm:$0xf]
    %v83 = vld [vmem:[#allocation2 + $0x7c] sm:$0xf]
    %v84 = vld [vmem:[#allocation2 + $0x80] sm:$0xf]
    %v85 = vld [vmem:[#allocation2 + $0x84] sm:$0xf]
    %v86 = vld [vmem:[#allocation2 + $0x88] sm:$0xf]
    %v87 = vld [vmem:[#allocation2 + $0x8c] sm:$0xf]
    %v88 = vld [vmem:[#allocation2 + $0x90] sm:$0xf]
    %v89 = vld [vmem:[#allocation2 + $0x94] sm:$0xf]
    %v90 = vld [vmem:[#allocation2 + $0x98] sm:$0xf]
    %v91 = vld [vmem:[#allocation2 + $0x9c] sm:$0xf]
    %v92 = vld [vmem:[#allocation2 + $0xa0] sm:$0xf]
    %v93 = vld [vmem:[#allocation2 + $0xa4] sm:$0xf]
    %v94 = vld [vmem:[#allocation2 + $0xa8] sm:$0xf]
    %v95 = vld [vmem:[#allocation2 + $0xac] sm:$0xf]
    %v96 = vld [vmem:[#allocation2 + $0xb0] sm:$0xf]
    %v97 = vld [vmem:[#allocation2 + $0xb4] sm:$0xf]
    %v98 = vld [vmem:[#allocation2 + $0xb8] sm:$0xf]
    %v99 = vld [vmem:[#allocation2 + $0xbc] sm:$0xf]
    %v100 = vld [vmem:[#allocation2 + $0xc0] sm:$0xf]
    %v101 = vld [vmem:[#allocation2 + $0xc4] sm:$0xf]
    %v102 = vld [vmem:[#allocation2 + $0xc8] sm:$0xf]
    %v103 = vld [vmem:[#allocation2 + $0xcc] sm:$0xf]
    %v104 = vld [vmem:[#allocation2 + $0xd0] sm:$0xf]
    %v105 = vld [vmem:[#allocation2 + $0xd4] sm:$0xf]
    %v106 = vld [vmem:[#allocation2 + $0xd8] sm:$0xf]
    %v107 = vld [vmem:[#allocation2 + $0xdc] sm:$0xf]
    %v108 = vld [vmem:[#allocation2 + $0xe0] sm:$0xf]
    %v109 = vld [vmem:[#allocation2 + $0xe4] sm:$0xf]
    %v110 = vld [vmem:[#allocation2 + $0xe8] sm:$0xf]
    %v111 = vld [vmem:[#allocation2 + $0xec] sm:$0xf]
    %v112 = vld [vmem:[#allocation2 + $0xf0] sm:$0xf]
    %v113 = vld [vmem:[#allocation2 + $0xf4] sm:$0xf]
    %v114 = vld [vmem:[#allocation2 + $0xf8] sm:$0xf]
    %v115 = vld [vmem:[#allocation2 + $0xfc] sm:$0xf]
    %v116 = vld [vmem:[#allocation2 + $0x100] sm:$0xf]
    %v117 = vld [vmem:[#allocation2 + $0x104] sm:$0xf]
    %v118 = vld [vmem:[#allocation2 + $0x108] sm:$0xf]
    %v119 = vld [vmem:[#allocation2 + $0x10c] sm:$0xf]
    %v120 = vld [vmem:[#allocation2 + $0x110] sm:$0xf]
    %v121 = vld [vmem:[#allocation2 + $0x114] sm:$0xf]
    %v122 = vld [vmem:[#allocation2 + $0x118] sm:$0xf]
    %v123 = vld [vmem:[#allocation2 + $0x11c] sm:$0xf]
    %v124 = vld [vmem:[#allocation2 + $0x120] sm:$0xf]
    %v125 = vld [vmem:[#allocation2 + $0x124] sm:$0xf]
    %v126 = vld [vmem:[#allocation2 + $0x128] sm:$0xf]
    %v127 = vld [vmem:[#allocation2 + $0x12c] sm:$0xf]
    %v128 = vld [vmem:[#allocation2 + $0x130] sm:$0xf]
    %v129 = vld [vmem:[#allocation2 + $0x134] sm:$0xf]
    %v130 = vld [vmem:[#allocation2 + $0x138] sm:$0xf]
    %v131 = vld [vmem:[#allocation2 + $0x13c] sm:$0xf]
    %v132 = vld [vmem:[#allocation2 + $0x140] sm:$0xf]
    %v133 = vld [vmem:[#allocation2 + $0x144] sm:$0xf]
    %v134 = vld [vmem:[#allocation2 + $0x148] sm:$0xf]
    %v135 = vld [vmem:[#allocation2 + $0x14c] sm:$0xf]
    %v136 = vld [vmem:[#allocation2 + $0x150] sm:$0xf]
    %v137 = vld [vmem:[#allocation2 + $0x154] sm:$0xf]
    %v138 = vld [vmem:[#allocation2 + $0x158] sm:$0xf]
    %v139 = vld [vmem:[#allocation2 + $0x15c] sm:$0xf]
    %v140 = vld [vmem:[#allocation2 + $0x160] sm:$0xf]
    %v141 = vld [vmem:[#allocation2 + $0x164] sm:$0xf]
    %v142 = vld [vmem:[#allocation2 + $0x168] sm:$0xf]
    %v143 = vld [vmem:[#allocation2 + $0x16c] sm:$0xf]
    %v144 = vld [vmem:[#allocation2 + $0x170] sm:$0xf]
    %v145 = vld [vmem:[#allocation2 + $0x174] sm:$0xf]
    %v146 = vld [vmem:[#allocation2 + $0x178] sm:$0xf]
    %v147 = vld [vmem:[#allocation2 + $0x17c] sm:$0xf]
    %v148 = vld [vmem:[#allocation2 + $0x180] sm:$0xf]
    %v149 = vld [vmem:[#allocation2 + $0x184] sm:$0xf]
    %v150 = vld [vmem:[%s2] sm:$0x1]
    %v152 = vperm.slane %v150, 0
    %v252 = vunpack.c.l.b16 %v52
    %v253 = vunpack.c.l.b16 %v53
    %v254 = vunpack.c.l.b16 %v54
    %v255 = vunpack.c.l.b16 %v55
    %v256 = vunpack.c.l.b16 %v56
    %v257 = vunpack.c.l.b16 %v57
    %v258 = vunpack.c.l.b16 %v58
    %v259 = vunpack.c.l.b16 %v59
    %v260 = vunpack.c.l.b16 %v60
    %v261 = vunpack.c.l.b16 %v61
    %v262 = vunpack.c.l.b16 %v62
    %v263 = vunpack.c.l.b16 %v63
    %v264 = vunpack.c.l.b16 %v64
    %v265 = vunpack.c.l.b16 %v65
    %v266 = vunpack.c.l.b16 %v66
    %v267 = vunpack.c.l.b16 %v67
    %v268 = vunpack.c.l.b16 %v68
    %v269 = vunpack.c.l.b16 %v69
    %v270 = vunpack.c.l.b16 %v70
    %v271 = vunpack.c.l.b16 %v71
    %v272 = vunpack.c.l.b16 %v72
    %v273 = vunpack.c.l.b16 %v73
    %v274 = vunpack.c.l.b16 %v74
    %v275 = vunpack.c.l.b16 %v75
    %v276 = vunpack.c.l.b16 %v76
    %v277 = vunpack.c.l.b16 %v77
    %v278 = vunpack.c.l.b16 %v78
    %v279 = vunpack.c.l.b16 %v79
    %v280 = vunpack.c.l.b16 %v80
    %v281 = vunpack.c.l.b16 %v81
    %v282 = vunpack.c.l.b16 %v82
    %v283 = vunpack.c.l.b16 %v83
    %v284 = vunpack.c.l.b16 %v84
    %v285 = vunpack.c.l.b16 %v85
    %v286 = vunpack.c.l.b16 %v86
    %v287 = vunpack.c.l.b16 %v87
    %v288 = vunpack.c.l.b16 %v88
    %v289 = vunpack.c.l.b16 %v89
    %v290 = vunpack.c.l.b16 %v90
    %v291 = vunpack.c.l.b16 %v91
    %v292 = vunpack.c.l.b16 %v92
    %v293 = vunpack.c.l.b16 %v93
    %v294 = vunpack.c.l.b16 %v94
    %v295 = vunpack.c.l.b16 %v95
    %v296 = vunpack.c.l.b16 %v96
    %v297 = vunpack.c.l.b16 %v97
    %v298 = vunpack.c.l.b16 %v98
    %v299 = vunpack.c.l.b16 %v99
    %v300 = vunpack.c.l.b16 %v100
    %v301 = vunpack.c.l.b16 %v101
    %v302 = vunpack.c.l.b16 %v102
    %v303 = vunpack.c.l.b16 %v103
    %v304 = vunpack.c.l.b16 %v104
    %v305 = vunpack.c.l.b16 %v105
    %v306 = vunpack.c.l.b16 %v106
    %v307 = vunpack.c.l.b16 %v107
    %v308 = vunpack.c.l.b16 %v108
    %v309 = vunpack.c.l.b16 %v109
    %v310 = vunpack.c.l.b16 %v110
    %v311 = vunpack.c.l.b16 %v111
    %v312 = vunpack.c.l.b16 %v112
    %v313 = vunpack.c.l.b16 %v113
    %v314 = vunpack.c.l.b16 %v114
    %v315 = vunpack.c.l.b16 %v115
    %v316 = vunpack.c.l.b16 %v116
    %v317 = vunpack.c.l.b16 %v117
    %v318 = vunpack.c.l.b16 %v118
    %v319 = vunpack.c.l.b16 %v119
    %v320 = vunpack.c.l.b16 %v120
    %v321 = vunpack.c.l.b16 %v121
    %v322 = vunpack.c.l.b16 %v122
    %v323 = vunpack.c.l.b16 %v123
    %v324 = vunpack.c.l.b16 %v124
    %v325 = vunpack.c.l.b16 %v125
    %v326 = vunpack.c.l.b16 %v126
    %v327 = vunpack.c.l.b16 %v127
    %v328 = vunpack.c.l.b16 %v128
    %v329 = vunpack.c.l.b16 %v129
    %v330 = vunpack.c.l.b16 %v130
    %v331 = vunpack.c.l.b16 %v131
    %v332 = vunpack.c.l.b16 %v132
    %v333 = vunpack.c.l.b16 %v133
    %v334 = vunpack.c.l.b16 %v134
    %v335 = vunpack.c.l.b16 %v135
    %v336 = vunpack.c.l.b16 %v136
    %v337 = vunpack.c.l.b16 %v137
    %v338 = vunpack.c.l.b16 %v138
    %v339 = vunpack.c.l.b16 %v139
    %v340 = vunpack.c.l.b16 %v140
    %v341 = vunpack.c.l.b16 %v141
    %v342 = vunpack.c.l.b16 %v142
    %v343 = vunpack.c.l.b16 %v143
    %v344 = vunpack.c.l.b16 %v144
    %v345 = vunpack.c.l.b16 %v145
    %v346 = vunpack.c.l.b16 %v146
    %v347 = vunpack.c.l.b16 %v147
    %v348 = vunpack.c.l.b16 %v148
    %v349 = vunpack.c.l.b16 %v149
    %v350 = vpack.c.b16 %v253, %v252
    %v351 = vpack.c.b16 %v255, %v254
    %v352 = vpack.c.b16 %v257, %v256
    %v353 = vpack.c.b16 %v259, %v258
    %v354 = vpack.c.b16 %v261, %v260
    %v355 = vpack.c.b16 %v263, %v262
    %v356 = vpack.c.b16 %v265, %v264
    %v357 = vpack.c.b16 %v267, %v266
    %v358 = vpack.c.b16 %v269, %v268
    %v359 = vpack.c.b16 %v271, %v270
    %v360 = vpack.c.b16 %v273, %v272
    %v361 = vpack.c.b16 %v275, %v274
    %v362 = vpack.c.b16 %v277, %v276
    %v363 = vpack.c.b16 %v279, %v278
    %v364 = vpack.c.b16 %v281, %v280
    %v365 = vpack.c.b16 %v283, %v282
    %v366 = vpack.c.b16 %v285, %v284
    %v367 = vpack.c.b16 %v287, %v286
    %v368 = vpack.c.b16 %v289, %v288
    %v369 = vpack.c.b16 %v291, %v290
    %v370 = vpack.c.b16 %v293, %v292
    %v371 = vpack.c.b16 %v295, %v294
    %v372 = vpack.c.b16 %v297, %v296
    %v373 = vpack.c.b16 %v299, %v298
    %v374 = vpack.c.b16 %v301, %v300
    %v375 = vpack.c.b16 %v303, %v302
    %v376 = vpack.c.b16 %v305, %v304
    %v377 = vpack.c.b16 %v307, %v306
    %v378 = vpack.c.b16 %v309, %v308
    %v379 = vpack.c.b16 %v311, %v310
    %v380 = vpack.c.b16 %v313, %v312
    %v381 = vpack.c.b16 %v315, %v314
    %v382 = vpack.c.b16 %v317, %v316
    %v383 = vpack.c.b16 %v319, %v318
    %v384 = vpack.c.b16 %v321, %v320
    %v385 = vpack.c.b16 %v323, %v322
    %v386 = vpack.c.b16 %v325, %v324
    %v387 = vpack.c.b16 %v327, %v326
    %v388 = vpack.c.b16 %v329, %v328
    %v389 = vpack.c.b16 %v331, %v330
    %v390 = vpack.c.b16 %v333, %v332
    %v391 = vpack.c.b16 %v335, %v334
    %v392 = vpack.c.b16 %v337, %v336
    %v393 = vpack.c.b16 %v339, %v338
    %v394 = vpack.c.b16 %v341, %v340
    %v395 = vpack.c.b16 %v343, %v342
    %v396 = vpack.c.b16 %v345, %v344
    %v397 = vpack.c.b16 %v347, %v346
    %v398 = vpack.c.b16 %v349, %v348
    %vm448 = vcmask 130048
    %v450 = vsel %vm448, %v51, 0
    %452 = vmatpush.bf16.msra.mxu0 %v357
    %453 = vmatpush.bf16.msra.mxu0 %v356
    %454 = vmatpush.bf16.msra.mxu0 %v355
    %455 = vmatpush.bf16.msra.mxu0 %v354
    %456 = vmatpush.bf16.msra.mxu0 %v353
    %457 = vmatpush.bf16.msra.mxu0 %v352
    %458 = vmatpush.bf16.msra.mxu0 %v351
    %459 = vmatpush.bf16.msra.mxu0 %v350
    %460 = vmatmul.bf16.gmra.mxu0 %v45
    %v461 = vpop.f32.mrf.mxu0
    %v462 = vadd.f32 %v152, %v461
    %v463 = vpop.f32.mrf.mxu0
    %464 = vdwg.mxu0
    %465 = vmatpush.bf16.msra.mxu0 %v365
    %466 = vmatpush.bf16.msra.mxu0 %v364
    %467 = vmatpush.bf16.msra.mxu0 %v363
    %468 = vmatpush.bf16.msra.mxu0 %v362
    %469 = vmatpush.bf16.msra.mxu0 %v361
    %470 = vmatpush.bf16.msra.mxu0 %v360
    %471 = vmatpush.bf16.msra.mxu0 %v359
    %472 = vmatpush.bf16.msra.mxu0 %v358
    %473 = vmatmul.bf16.gmra.mxu0 %v46
    %v474 = vpop.f32.mrf.mxu0
    %v475 = vadd.f32 %v462, %v474
    %v476 = vpop.f32.mrf.mxu0
    %477 = vdwg.mxu0
    %478 = vmatpush.bf16.msra.mxu0 %v373
    %479 = vmatpush.bf16.msra.mxu0 %v372
    %480 = vmatpush.bf16.msra.mxu0 %v371
    %481 = vmatpush.bf16.msra.mxu0 %v370
    %482 = vmatpush.bf16.msra.mxu0 %v369
    %483 = vmatpush.bf16.msra.mxu0 %v368
    %484 = vmatpush.bf16.msra.mxu0 %v367
    %485 = vmatpush.bf16.msra.mxu0 %v366
    %486 = vmatmul.bf16.gmra.mxu0 %v47
    %v487 = vpop.f32.mrf.mxu0
    %v488 = vadd.f32 %v475, %v487
    %v489 = vpop.f32.mrf.mxu0
    %490 = vdwg.mxu0
    %491 = vmatpush.bf16.msra.mxu0 %v381
    %492 = vmatpush.bf16.msra.mxu0 %v380
    %493 = vmatpush.bf16.msra.mxu0 %v379
    %494 = vmatpush.bf16.msra.mxu0 %v378
    %495 = vmatpush.bf16.msra.mxu0 %v377
    %496 = vmatpush.bf16.msra.mxu0 %v376
    %497 = vmatpush.bf16.msra.mxu0 %v375
    %498 = vmatpush.bf16.msra.mxu0 %v374
    %499 = vmatmul.bf16.gmra.mxu0 %v48
    %v500 = vpop.f32.mrf.mxu0
    %v501 = vadd.f32 %v488, %v500
    %v502 = vpop.f32.mrf.mxu0
    %503 = vdwg.mxu0
    %504 = vmatpush.bf16.msra.mxu0 %v389
    %505 = vmatpush.bf16.msra.mxu0 %v388
    %506 = vmatpush.bf16.msra.mxu0 %v387
    %507 = vmatpush.bf16.msra.mxu0 %v386
    %508 = vmatpush.bf16.msra.mxu0 %v385
    %509 = vmatpush.bf16.msra.mxu0 %v384
    %510 = vmatpush.bf16.msra.mxu0 %v383
    %511 = vmatpush.bf16.msra.mxu0 %v382
    %512 = vmatmul.bf16.gmra.mxu0 %v49
    %v513 = vpop.f32.mrf.mxu0
    %v514 = vadd.f32 %v501, %v513
    %v515 = vpop.f32.mrf.mxu0
    %516 = vdwg.mxu0
    %517 = vmatpush.bf16.msra.mxu0 %v397
    %518 = vmatpush.bf16.msra.mxu0 %v396
    %519 = vmatpush.bf16.msra.mxu0 %v395
    %520 = vmatpush.bf16.msra.mxu0 %v394
    %521 = vmatpush.bf16.msra.mxu0 %v393
    %522 = vmatpush.bf16.msra.mxu0 %v392
    %523 = vmatpush.bf16.msra.mxu0 %v391
    %524 = vmatpush.bf16.msra.mxu0 %v390
    %525 = vmatmul.bf16.gmra.mxu0 %v50
    %v526 = vpop.f32.mrf.mxu0
    %v527 = vadd.f32 %v514, %v526
    %v528 = vpop.f32.mrf.mxu0
    %529 = vdwg.mxu0
    %530 = vmatpush.bf16.msra.mxu0 0
    %531 = vmatpush.bf16.msra.mxu0 0
    %532 = vmatpush.bf16.msra.mxu0 0
    %533 = vmatpush.bf16.msra.mxu0 0
    %534 = vmatpush.bf16.msra.mxu0 0
    %535 = vmatpush.bf16.msra.mxu0 0
    %536 = vmatpush.bf16.msra.mxu0 0
    %537 = vmatpush.bf16.msra.mxu0 %v398
    %538 = vmatmul.bf16.gmra.mxu0 %v450
    %v539 = vpop.f32.mrf.mxu0
    %v540 = vadd.f32 %v527, %v539
    %v541 = vpop.f32.mrf.mxu0
    %542 = vdwg.mxu0
    %v543 = vmax.f32 %v540, 0.0
    %v544 = vpack.c.bf16 %v543, %v543
    %v545 = vld [vmem:[%s3] sm:$0xf]
    %v546 = vld [vmem:[%s3 + $0x4] sm:$0xf]
    %v547 = vld [vmem:[%s3 + $0x8] sm:$0xf]
    %v548 = vld [vmem:[%s3 + $0xc] sm:$0xf]
    %v549 = vld [vmem:[%s3 + $0x10] sm:$0xf]
    %v550 = vld [vmem:[%s3 + $0x14] sm:$0xf]
    %v551 = vld [vmem:[%s3 + $0x18] sm:$0xf]
    %v552 = vld [vmem:[%s3 + $0x1c] sm:$0xf]
    %v553 = vld [vmem:[%s3 + $0x20] sm:$0xf]
    %v554 = vld [vmem:[%s3 + $0x24] sm:$0xf]
    %v555 = vld [vmem:[%s3 + $0x28] sm:$0xf]
    %v556 = vld [vmem:[%s3 + $0x2c] sm:$0xf]
    %v557 = vld [vmem:[%s3 + $0x30] sm:$0xf]
    %v558 = vld [vmem:[%s3 + $0x34] sm:$0xf]
    %v559 = vld [vmem:[%s3 + $0x38] sm:$0xf]
    %v560 = vld [vmem:[%s3 + $0x3c] sm:$0xf]
    %v561 = vld [vmem:[%s4] sm:$0x1]
    %v563 = vperm.slane %v561, 0
    %v581 = vunpack.c.l.b16 %v545
    %v582 = vunpack.c.l.b16 %v546
    %v583 = vunpack.c.l.b16 %v547
    %v584 = vunpack.c.l.b16 %v548
    %v585 = vunpack.c.l.b16 %v549
    %v586 = vunpack.c.l.b16 %v550
    %v587 = vunpack.c.l.b16 %v551
    %v588 = vunpack.c.l.b16 %v552
    %v589 = vunpack.c.l.b16 %v553
    %v590 = vunpack.c.l.b16 %v554
    %v591 = vunpack.c.l.b16 %v555
    %v592 = vunpack.c.l.b16 %v556
    %v593 = vunpack.c.l.b16 %v557
    %v594 = vunpack.c.l.b16 %v558
    %v595 = vunpack.c.l.b16 %v559
    %v596 = vunpack.c.l.b16 %v560
    %v597 = vpack.c.b16 %v582, %v581
    %v598 = vpack.c.b16 %v584, %v583
    %v599 = vpack.c.b16 %v586, %v585
    %v600 = vpack.c.b16 %v588, %v587
    %v601 = vpack.c.b16 %v590, %v589
    %v602 = vpack.c.b16 %v592, %v591
    %v603 = vpack.c.b16 %v594, %v593
    %v604 = vpack.c.b16 %v596, %v595
    %613 = vmatpush.bf16.msra.mxu0 %v604
    %614 = vmatpush.bf16.msra.mxu0 %v603
    %615 = vmatpush.bf16.msra.mxu0 %v602
    %616 = vmatpush.bf16.msra.mxu0 %v601
    %617 = vmatpush.bf16.msra.mxu0 %v600
    %618 = vmatpush.bf16.msra.mxu0 %v599
    %619 = vmatpush.bf16.msra.mxu0 %v598
    %620 = vmatpush.bf16.msra.mxu0 %v597
    %621 = vmatmul.bf16.gmra.mxu0 %v544
    %v622 = vpop.f32.mrf.mxu0
    %v623 = vadd.f32 %v563, %v622
    %v624 = vpop.f32.mrf.mxu0
    %625 = vdwg.mxu0
    %vm626 = vcmask 80896
    %627 = vst.msk [vmem:[#allocation5] sm:$0xff] %vm626, %v623
    // Predicated region
    $region26: #{tpu_custom_call.1} parent=1 // pred_check
      _
    $region27: #{tpu_custom_call.1} parent=1 // pred_check_branch
      %629 = sbr.rel (0) target = $region29
    $region28: #{tpu_custom_call.1} parent=1 // pred_region
      %631 = vsyncadd [#allocation4], 0
      %s633 = sshll.u32 [#allocation5], 4
      %s634 = int_to_ptr.vmem [resolvable:$true] %s633
      %s635 = sshll.u32 %s5, 4
      %s636 = int_to_ptr.hbm [resolvable:$true] %s635
      %638 = dma.vmem_to_hbm [thread:$0]  %s634, 128, %s636, [#allocation4]
    $region29: #{tpu_custom_call.1} parent=1 // pred_fallthru
      _
    // Predicated region
    $region30: #{tpu_custom_call.1} parent=1 // pred_check
      _
    $region31: #{tpu_custom_call.1} parent=1 // pred_check_branch
      %640 = sbr.rel (0) target = $region33
    $region32: #{tpu_custom_call.1} parent=1 // pred_region
      %642 = dma.done [#allocation4], 128
    $region33: #{tpu_custom_call.1} parent=1 // pred_fallthru
      _
    %643 = vsyncpa [#allocation3], 1
    %644 = vsyncpa [#allocation4], 1

</llo_original>
